<compile_context>
chip_gen: v7x
topology: tpu7x:2x2x1
jax: 0.10.0
libtpu: 0.0.40
codegen_flags: <defaults>
</compile_context>

<pallas_src>
import jax
import jax.numpy as jnp
from jax.experimental import pallas as pl
from jax.experimental.pallas import tpu as pltpu


# --------------------------------------------------------------------------- #
# Kernel
# --------------------------------------------------------------------------- #
def _make_kernel(bb_count):
    def kernel(qp_ref, kpt_ref, mask_ref, kpm_ref, qc_ref, o_ref):
        # attn-mask tile is shared by every folded batch in this grid step.
        attn_bad = mask_ref[...] != 0                            # (TQ, L) bool

        for bb in range(bb_count):                               # BB <= 4, unrolled
            # Plain NN score matmul: kp was pre-transposed host-side and
            # 1/sqrt(H) is already folded into qp -> no in-kernel transpose/scale.
            s = jnp.dot(qp_ref[bb], kpt_ref[bb],
                        preferred_element_type=jnp.float32)      # (TQ, L)
            s = s * qc_ref[bb].astype(jnp.float32)               # qc_score
            # 1 - sigmoid(x) == 0.5 * (1 - tanh(x/2)): single EUP op.
            s = 0.5 - 0.5 * jnp.tanh(0.5 * s)
            # s in (0,1) -> no softmax max-subtraction needed; masked entries
            # contribute exp(-inf) == 0 directly.  Fully-masked rows give
            # 0 * inf = NaN, matching the PyTorch reference.
            bad = attn_bad | (kpm_ref[bb] != 0)                  # (TQ,L)|(1,L)
            e = jnp.where(bad, 0.0, jnp.exp(s))
            denom = jnp.sum(e, axis=-1, keepdims=True)
            o_ref[bb] = (e * pl.reciprocal(denom, approx=False)).astype(o_ref.dtype)

    return kernel


# --------------------------------------------------------------------------- #
# Host-side heuristics
# --------------------------------------------------------------------------- #
def _vmem_budget_bytes():
    """~75% of physical VMEM per core; conservative fallback fits v7x (64 MiB)."""
    try:
        info = pltpu.get_tpu_info()
        cap = getattr(info, "vmem_capacity_bytes", None)
        if cap:
            return int(cap) * 3 // 4
    except Exception:
        pass
    return 48 * 1024 * 1024


def _estimate_vmem_bytes(bb, tq, L, H, qc_sz, out_sz):
    per_buf = (bb * tq * H * 4          # qp tile (f32)
               + bb * H * L * 4         # kp^T block (f32)
               + tq * L                 # attn mask (int8)
               + bb * L                 # key-padding mask (int8)
               + bb * tq * L * qc_sz    # qc tile
               + bb * tq * L * out_sz)  # out tile
    return 2 * per_buf                  # default double-buffered pipeline


def _pick_query_tile(L, H, budget, qc_sz, out_sz):
    """Largest multiple-of-32 tile (int8-mask friendly) dividing L that fits."""
    if L % 32 != 0:
        return L                        # full-extent block is always legal
    best = 32
    tq = 32
    while tq <= min(L, 512):
        if L % tq == 0 and _estimate_vmem_bytes(1, tq, L, H, qc_sz, out_sz) <= budget * 0.6:
            best = tq
        tq += 32
    return best


def _pick_batch_block(B, L, TQ, H, budget, qc_sz, out_sz):
    """Fold batches only for small full-L tiles; cap at 4 (vreg pressure)."""
    if TQ != L or L > 128:
        return 1
    bb = 1
    for cand in range(2, min(B, 4) + 1):
        if B % cand == 0 and _estimate_vmem_bytes(cand, TQ, L, H, qc_sz, out_sz) <= budget * 0.6:
            bb = cand
    return bb


# --------------------------------------------------------------------------- #
# Reference (also serves as the tiny-problem XLA fallback path)
# --------------------------------------------------------------------------- #
def _reference(q, k, attn_mask, key_padding_mask, qc_score, wq, bq, wk, bk):
    H = q.shape[-1]
    qp = q @ wq.T + bq
    kp = k @ wk.T + bk
    s = jnp.einsum("bqh,bkh->bqk", qp, kp) * (float(H) ** -0.5)
    s = s * qc_score
    s = 1.0 - jax.nn.sigmoid(s)
    s = jnp.where(jnp.asarray(attn_mask, bool)[None], -jnp.inf, s)
    s = jnp.where(jnp.asarray(key_padding_mask, bool)[:, None, :], -jnp.inf, s)
    return jax.nn.softmax(s, axis=-1)


# --------------------------------------------------------------------------- #
# Public wrapper
# --------------------------------------------------------------------------- #
def attention_score_trivial(q, k, attn_mask, key_padding_mask, qc_score,
                            wq, bq, wk, bk, *, low_precision_streams=False):
    """q,k: (B,L,H); attn_mask: (L,L); key_padding_mask: (B,L); qc_score: (B,L,L);
    wq,wk: (H,H) in PyTorch (out,in) layout; bq,bk: (H,).
    low_precision_streams=True streams qc / out in bf16 (recommended on v5e)."""
    B, L, H = q.shape
    scale = float(H) ** (-0.5)

    q32 = jnp.asarray(q, jnp.float32)
    k32 = jnp.asarray(k, jnp.float32)
    wq32 = jnp.asarray(wq, jnp.float32)
    bq32 = jnp.asarray(bq, jnp.float32)
    wk32 = jnp.asarray(wk, jnp.float32)
    bk32 = jnp.asarray(bk, jnp.float32)

    # Tiny problems: per-step overhead + masked tiny stores make Pallas lose to
    # plain XLA fusion -> dispatch to the reference path.
    if L < 32 or L * L <= 1024:
        return _reference(q32, k32, attn_mask, key_padding_mask,
                          jnp.asarray(qc_score, jnp.float32),
                          wq32, bq32, wk32, bk32)

    # Projections hoisted out of the kernel: removes the kp VMEM scratch carry +
    # in-kernel weight streams (fits v7x VMEM) and decouples the grid axes.
    # 1/sqrt(H) is folded into qp; kp is produced pre-transposed (B,H,L) so the
    # in-kernel score matmul is a plain NN contraction.
    qp = (jnp.einsum("blh,oh->blo", q32, wq32) + bq32) * scale          # (B,L,H)
    kpt = jnp.einsum("blh,oh->bol", k32, wk32) + bk32[None, :, None]    # (B,H,L)

    stream_dtype = jnp.bfloat16 if low_precision_streams else jnp.float32
    qc = jnp.asarray(qc_score, stream_dtype)                            # (B,L,L)
    mask_i8 = jnp.asarray(attn_mask, jnp.int8)                          # (L,L)
    kpm_i8 = jnp.asarray(key_padding_mask, jnp.int8).reshape(B, 1, L)   # (B,1,L)

    qc_sz = jnp.dtype(stream_dtype).itemsize
    out_sz = qc_sz
    budget = _vmem_budget_bytes()
    TQ = _pick_query_tile(L, H, budget, qc_sz, out_sz)
    BB = _pick_batch_block(B, L, TQ, H, budget, qc_sz, out_sz)
    grid = (B // BB, L // TQ)

    kernel = _make_kernel(BB)

    # TODO(synk): for very large H*L the double-buffered kp^T block dominates
    # VMEM; single-buffer it (pipeline_mode=pl.Buffered(1)) or K-tile the score
    # matmul when that footprint approaches the budget.
    return pl.pallas_call(
        kernel,
        out_shape=jax.ShapeDtypeStruct((B, L, L), stream_dtype),
        grid_spec=pltpu.PrefetchScalarGridSpec(
            num_scalar_prefetch=0,
            grid=grid,
            in_specs=[
                pl.BlockSpec((BB, TQ, H), lambda b, i: (b, i, 0)),   # qp (scaled)
                pl.BlockSpec((BB, H, L), lambda b, i: (b, 0, 0)),    # kp^T
                pl.BlockSpec((TQ, L), lambda b, i: (i, 0)),          # attn_mask (i8)
                pl.BlockSpec((BB, 1, L), lambda b, i: (b, 0, 0)),    # key_padding (i8)
                pl.BlockSpec((BB, TQ, L), lambda b, i: (b, i, 0)),   # qc_score
            ],
            out_specs=pl.BlockSpec((BB, TQ, L), lambda b, i: (b, i, 0)),
        ),
        compiler_params=pltpu.CompilerParams(
            # No cross-step state -> both grid axes are megacore-shardable.
            dimension_semantics=("parallel", "parallel"),
            vmem_limit_bytes=budget,
        ),
    )(qp, kpt, mask_i8, kpm_i8, qc)


# --------------------------------------------------------------------------- #
# Demo / correctness check
# --------------------------------------------------------------------------- #
if __name__ == "__main__":
    B, L, H = 2, 128, 32
    key = jax.random.PRNGKey(0)
    kq, kk, kwq, kbq, kwk, kbk, kqc = jax.random.split(key, 7)

    # PyTorch Linear default init: U(-1/sqrt(H), 1/sqrt(H)), weight is (out, in).
    bound = 1.0 / (H ** 0.5)
    wq = jax.random.uniform(kwq, (H, H), jnp.float32, -bound, bound)
    bq = jax.random.uniform(kbq, (H,), jnp.float32, -bound, bound)
    wk = jax.random.uniform(kwk, (H, H), jnp.float32, -bound, bound)
    bk = jax.random.uniform(kbk, (H,), jnp.float32, -bound, bound)

    q = jax.random.normal(kq, (B, L, H), jnp.float32)
    k = jax.random.normal(kk, (B, L, H), jnp.float32)
    qc_score = jax.random.uniform(kqc, (B, L, L), jnp.float32, 0.5, 1.5)

    # Causal-style attn_mask; batch 1 has its last 2 keys padded.
    attn_mask = jnp.triu(jnp.ones((L, L), dtype=jnp.bool_), k=1)
    key_padding_mask = jnp.zeros((B, L), dtype=jnp.bool_).at[1, -2:].set(True)

    # Pallas path.
    out = attention_score_trivial(q, k, attn_mask, key_padding_mask, qc_score,
                                  wq, bq, wk, bk)
    out = jax.block_until_ready(out)

    ref = _reference(q, k, attn_mask, key_padding_mask, qc_score, wq, bq, wk, bk)
    assert out.shape == (B, L, L)
    assert jnp.allclose(out, ref, atol=1e-5, rtol=1e-5), "mismatch vs reference"

    # Tiny-shape path (dispatches to the XLA fallback).
    Ls = 8
    out_s = attention_score_trivial(q[:, :Ls], k[:, :Ls], attn_mask[:Ls, :Ls],
                                    key_padding_mask[:, :Ls],
                                    qc_score[:, :Ls, :Ls], wq, bq, wk, bk)
    ref_s = _reference(q[:, :Ls], k[:, :Ls], attn_mask[:Ls, :Ls],
                       key_padding_mask[:, :Ls], qc_score[:, :Ls, :Ls],
                       wq, bq, wk, bk)
    assert jnp.allclose(out_s, ref_s, atol=1e-5, rtol=1e-5), "tiny-path mismatch"

    print("KERNEL_OK")
</pallas_src>

<mosaic_0001>
module attributes {stable_mosaic.version = 11 : i64} {
  func.func @kernel(%arg0: i32, %arg1: i32, %arg2: memref<2x128x32xf32, #tpu.memory_space<vmem>>, %arg3: memref<2x32x128xf32, #tpu.memory_space<vmem>>, %arg4: memref<128x128xi8, #tpu.memory_space<vmem>>, %arg5: memref<2x1x128xi8, #tpu.memory_space<vmem>>, %arg6: memref<2x128x128xf32, #tpu.memory_space<vmem>>, %arg7: memref<2x128x128xf32, #tpu.memory_space<vmem>>) attributes {dimension_semantics = [#tpu.dimension_semantics<parallel>, #tpu.dimension_semantics<parallel>], iteration_bounds = array<i64: 1, 1>, scalar_prefetch = 0 : i64, scratch_operands = 0 : i64, tpu.core_type = #tpu.core_type<tc>, window_params = [{transform_indices = @transform_0, window_bounds = array<i64: 2, 128, 32>}, {transform_indices = @transform_1, window_bounds = array<i64: 2, 32, 128>}, {transform_indices = @transform_2, window_bounds = array<i64: 128, 128>}, {transform_indices = @transform_3, window_bounds = array<i64: 2, 1, 128>}, {transform_indices = @transform_4, window_bounds = array<i64: 2, 128, 128>}, {transform_indices = @transform_5, window_bounds = array<i64: 2, 128, 128>}]} {
    %c0 = arith.constant 0 : index
    %c0_0 = arith.constant 0 : index
    %0 = vector.load %arg4[%c0, %c0_0] : memref<128x128xi8, #tpu.memory_space<vmem>>, vector<128x128xi8>
    %c0_i8 = arith.constant 0 : i8
    %1 = vector.broadcast %c0_i8 : i8 to vector<128x128xi8>
    %2 = arith.cmpi ne, %0, %1 : vector<128x128xi8>
    %c0_1 = arith.constant 0 : index
    %c0_2 = arith.constant 0 : index
    %c0_3 = arith.constant 0 : index
    %3 = vector.load %arg2[%c0_1, %c0_2, %c0_3] : memref<2x128x32xf32, #tpu.memory_space<vmem>>, vector<1x128x32xf32>
    %4 = vector.shape_cast %3 : vector<1x128x32xf32> to vector<128x32xf32>
    %c0_4 = arith.constant 0 : index
    %c0_5 = arith.constant 0 : index
    %c0_6 = arith.constant 0 : index
    %5 = vector.load %arg3[%c0_4, %c0_5, %c0_6] : memref<2x32x128xf32, #tpu.memory_space<vmem>>, vector<1x32x128xf32>
    %6 = vector.shape_cast %5 : vector<1x32x128xf32> to vector<32x128xf32>
    %cst = arith.constant dense<0.000000e+00> : vector<128x128xf32>
    %7 = tpu.matmul %4, %6, %cst {dimension_numbers = #tpu.dot_dimension_numbers<[1], [0], [0], [1], [0, 0, 1, 1], [], []>} : vector<128x32xf32>, vector<32x128xf32>, vector<128x128xf32> -> vector<128x128xf32>
    %c0_7 = arith.constant 0 : index
    %c0_8 = arith.constant 0 : index
    %c0_9 = arith.constant 0 : index
    %8 = vector.load %arg6[%c0_7, %c0_8, %c0_9] : memref<2x128x128xf32, #tpu.memory_space<vmem>>, vector<1x128x128xf32>
    %9 = vector.shape_cast %8 : vector<1x128x128xf32> to vector<128x128xf32>
    %10 = arith.mulf %7, %9 : vector<128x128xf32>
    %cst_10 = arith.constant 5.000000e-01 : f32
    %11 = vector.broadcast %cst_10 : f32 to vector<128x128xf32>
    %12 = arith.mulf %11, %10 : vector<128x128xf32>
    %13 = math.tanh %12 : vector<128x128xf32>
    %cst_11 = arith.constant 5.000000e-01 : f32
    %14 = vector.broadcast %cst_11 : f32 to vector<128x128xf32>
    %15 = arith.mulf %14, %13 : vector<128x128xf32>
    %cst_12 = arith.constant 5.000000e-01 : f32
    %16 = vector.broadcast %cst_12 : f32 to vector<128x128xf32>
    %17 = arith.subf %16, %15 : vector<128x128xf32>
    %c0_13 = arith.constant 0 : index
    %c0_14 = arith.constant 0 : index
    %c0_15 = arith.constant 0 : index
    %18 = vector.load %arg5[%c0_13, %c0_14, %c0_15] : memref<2x1x128xi8, #tpu.memory_space<vmem>>, vector<1x1x128xi8>
    %19 = vector.shape_cast %18 : vector<1x1x128xi8> to vector<1x128xi8>
    %c0_i8_16 = arith.constant 0 : i8
    %20 = vector.broadcast %c0_i8_16 : i8 to vector<1x128xi8>
    %21 = arith.cmpi ne, %19, %20 : vector<1x128xi8>
    %22 = vector.broadcast %21 : vector<1x128xi1> to vector<128x128xi1>
    %23 = arith.ori %2, %22 : vector<128x128xi1>
    %24 = math.exp %17 : vector<128x128xf32>
    %cst_17 = arith.constant 0.000000e+00 : f32
    %25 = vector.broadcast %cst_17 : f32 to vector<128x128xf32>
    %26 = arith.select %23, %25, %24 : vector<128x128xi1>, vector<128x128xf32>
    %cst_18 = arith.constant dense<0.000000e+00> : vector<128xf32>
    %27 = vector.multi_reduction <add>, %26, %cst_18 [1] : vector<128x128xf32> to vector<128xf32>
    %28 = vector.shape_cast %27 : vector<128xf32> to vector<128x1xf32>
    %29 = tpu.reciprocal %28 : vector<128x1xf32> -> vector<128x1xf32>
    %30 = vector.broadcast %29 : vector<128x1xf32> to vector<128x128xf32>
    %31 = arith.mulf %26, %30 : vector<128x128xf32>
    %c0_19 = arith.constant 0 : index
    %c0_20 = arith.constant 0 : index
    %c0_21 = arith.constant 0 : index
    %32 = vector.load %arg7[%c0_19, %c0_20, %c0_21] : memref<2x128x128xf32, #tpu.memory_space<vmem>>, vector<1x128x128xf32>
    %33 = vector.shape_cast %32 : vector<1x128x128xf32> to vector<128x128xf32>
    %34 = vector.shape_cast %31 : vector<128x128xf32> to vector<1x128x128xf32>
    tpu.vector_store %arg7[%c0_19, %c0_20, %c0_21], %34 {strides = array<i32>} : memref<2x128x128xf32, #tpu.memory_space<vmem>>, vector<1x128x128xf32>,
    %c1 = arith.constant 1 : index
    %c0_22 = arith.constant 0 : index
    %c0_23 = arith.constant 0 : index
    %35 = vector.load %arg2[%c1, %c0_22, %c0_23] : memref<2x128x32xf32, #tpu.memory_space<vmem>>, vector<1x128x32xf32>
    %36 = vector.shape_cast %35 : vector<1x128x32xf32> to vector<128x32xf32>
    %c1_24 = arith.constant 1 : index
    %c0_25 = arith.constant 0 : index
    %c0_26 = arith.constant 0 : index
    %37 = vector.load %arg3[%c1_24, %c0_25, %c0_26] : memref<2x32x128xf32, #tpu.memory_space<vmem>>, vector<1x32x128xf32>
    %38 = vector.shape_cast %37 : vector<1x32x128xf32> to vector<32x128xf32>
    %cst_27 = arith.constant dense<0.000000e+00> : vector<128x128xf32>
    %39 = tpu.matmul %36, %38, %cst_27 {dimension_numbers = #tpu.dot_dimension_numbers<[1], [0], [0], [1], [0, 0, 1, 1], [], []>} : vector<128x32xf32>, vector<32x128xf32>, vector<128x128xf32> -> vector<128x128xf32>
    %c1_28 = arith.constant 1 : index
    %c0_29 = arith.constant 0 : index
    %c0_30 = arith.constant 0 : index
    %40 = vector.load %arg6[%c1_28, %c0_29, %c0_30] : memref<2x128x128xf32, #tpu.memory_space<vmem>>, vector<1x128x128xf32>
    %41 = vector.shape_cast %40 : vector<1x128x128xf32> to vector<128x128xf32>
    %42 = arith.mulf %39, %41 : vector<128x128xf32>
    %cst_31 = arith.constant 5.000000e-01 : f32
    %43 = vector.broadcast %cst_31 : f32 to vector<128x128xf32>
    %44 = arith.mulf %43, %42 : vector<128x128xf32>
    %45 = math.tanh %44 : vector<128x128xf32>
    %cst_32 = arith.constant 5.000000e-01 : f32
    %46 = vector.broadcast %cst_32 : f32 to vector<128x128xf32>
    %47 = arith.mulf %46, %45 : vector<128x128xf32>
    %cst_33 = arith.constant 5.000000e-01 : f32
    %48 = vector.broadcast %cst_33 : f32 to vector<128x128xf32>
    %49 = arith.subf %48, %47 : vector<128x128xf32>
    %c1_34 = arith.constant 1 : index
    %c0_35 = arith.constant 0 : index
    %c0_36 = arith.constant 0 : index
    %50 = vector.load %arg5[%c1_34, %c0_35, %c0_36] : memref<2x1x128xi8, #tpu.memory_space<vmem>>, vector<1x1x128xi8>
    %51 = vector.shape_cast %50 : vector<1x1x128xi8> to vector<1x128xi8>
    %c0_i8_37 = arith.constant 0 : i8
    %52 = vector.broadcast %c0_i8_37 : i8 to vector<1x128xi8>
    %53 = arith.cmpi ne, %51, %52 : vector<1x128xi8>
    %54 = vector.broadcast %53 : vector<1x128xi1> to vector<128x128xi1>
    %55 = arith.ori %2, %54 : vector<128x128xi1>
    %56 = math.exp %49 : vector<128x128xf32>
    %cst_38 = arith.constant 0.000000e+00 : f32
    %57 = vector.broadcast %cst_38 : f32 to vector<128x128xf32>
    %58 = arith.select %55, %57, %56 : vector<128x128xi1>, vector<128x128xf32>
    %cst_39 = arith.constant dense<0.000000e+00> : vector<128xf32>
    %59 = vector.multi_reduction <add>, %58, %cst_39 [1] : vector<128x128xf32> to vector<128xf32>
    %60 = vector.shape_cast %59 : vector<128xf32> to vector<128x1xf32>
    %61 = tpu.reciprocal %60 : vector<128x1xf32> -> vector<128x1xf32>
    %62 = vector.broadcast %61 : vector<128x1xf32> to vector<128x128xf32>
    %63 = arith.mulf %58, %62 : vector<128x128xf32>
    %c1_40 = arith.constant 1 : index
    %c0_41 = arith.constant 0 : index
    %c0_42 = arith.constant 0 : index
    %64 = vector.load %arg7[%c1_40, %c0_41, %c0_42] : memref<2x128x128xf32, #tpu.memory_space<vmem>>, vector<1x128x128xf32>
    %65 = vector.shape_cast %64 : vector<1x128x128xf32> to vector<128x128xf32>
    %66 = vector.shape_cast %63 : vector<128x128xf32> to vector<1x128x128xf32>
    tpu.vector_store %arg7[%c1_40, %c0_41, %c0_42], %66 {strides = array<i32>} : memref<2x128x128xf32, #tpu.memory_space<vmem>>, vector<1x128x128xf32>,
    return
  }
  func.func @transform_0(%arg0: i32, %arg1: i32) -> (i32, i32, i32) {
    %c0_i32 = arith.constant 0 : i32
    %c0_i32_0 = arith.constant 0 : i32
    return %arg0, %arg1, %c0_i32 : i32, i32, i32
  }
  func.func @transform_1(%arg0: i32, %arg1: i32) -> (i32, i32, i32) {
    %c0_i32 = arith.constant 0 : i32
    %c0_i32_0 = arith.constant 0 : i32
    %c0_i32_1 = arith.constant 0 : i32
    return %arg0, %c0_i32, %c0_i32_0 : i32, i32, i32
  }
  func.func @transform_2(%arg0: i32, %arg1: i32) -> (i32, i32) {
    %c0_i32 = arith.constant 0 : i32
    %c0_i32_0 = arith.constant 0 : i32
    return %arg1, %c0_i32 : i32, i32
  }
  func.func @transform_3(%arg0: i32, %arg1: i32) -> (i32, i32, i32) {
    %c0_i32 = arith.constant 0 : i32
    %c0_i32_0 = arith.constant 0 : i32
    %c0_i32_1 = arith.constant 0 : i32
    return %arg0, %c0_i32, %c0_i32_0 : i32, i32, i32
  }
  func.func @transform_4(%arg0: i32, %arg1: i32) -> (i32, i32, i32) {
    %c0_i32 = arith.constant 0 : i32
    %c0_i32_0 = arith.constant 0 : i32
    return %arg0, %arg1, %c0_i32 : i32, i32, i32
  }
  func.func @transform_5(%arg0: i32, %arg1: i32) -> (i32, i32, i32) {
    %c0_i32 = arith.constant 0 : i32
    %c0_i32_0 = arith.constant 0 : i32
    return %arg0, %arg1, %c0_i32 : i32, i32, i32
  }
}

</mosaic_0001>

<llo_original>
// kernel: tpu_custom_call.1
$region0: #{tpu_custom_call.1}
  #allocation0 [shape = 'u32[]', space=smem, size = 0x4, offset = 0x4, fixed_abs, tag = 'smem constant byte address 0x4 - core index']
  #allocation1 [shape = 'u32[144,128]{1,0:T(1,128)}', space=vmem, size = 0x12000, scoped, tag = 'internal scratch']
  %s0 = inlined_call_operand.vmem [shape: f32[2,128,32], index: 0, kind: input, shape index: {}]
  %s1 = inlined_call_operand.vmem [shape: f32[2,32,128], index: 1, kind: input, shape index: {}]
  %s2 = inlined_call_operand.hbm [shape: s8[128,128], index: 2, kind: input, shape index: {}]
  %s3 = inlined_call_operand.vmem [shape: s8[2,1,128], index: 3, kind: input, shape index: {}]
  %s4 = inlined_call_operand.vmem [shape: f32[2,128,128], index: 4, kind: input, shape index: {}]
  %s5 = inlined_call_operand.hbm [shape: f32[2,128,128], index: 5, kind: output, shape index: {}]
  %s6 = sld [smem:[#allocation0]]
  $region34: #{tpu_custom_call.1} parent=0
    _
  %s8 = ssub.s32 1, %s6
  %s9 = scalar_select 0, %s8, %s6
  $region1: #{tpu_custom_call.1} parent=0
    #allocation2 [shape = 'u8[16384]{0}', space=vmem, size = 0x4000, scoped, tag = 'input window, operand 2, single buffered']
    #allocation3 [shape = 's32[1]{0}', space=sflag, size = 0x4, scoped, tag = 'scoped memory for tpu_custom_call.1']
    #allocation4 [shape = 's32[1]{0}', space=sflag, size = 0x4, scoped, tag = 'scoped memory for tpu_custom_call.1']
    #allocation5 [shape = 'u8[131072]{0}', space=vmem, size = 0x20000, scoped, tag = 'output window, operand 0, single buffered']
    %10 = vsyncpa [#allocation3], 0
    %11 = vsyncpa [#allocation4], 0
    // Predicated region
    $region2: #{tpu_custom_call.1} parent=1 // pred_check
      _
    $region3: #{tpu_custom_call.1} parent=1 // pred_check_branch
      %13 = sbr.rel (0) target = $region5
    $region4: #{tpu_custom_call.1} parent=1 // pred_region
      _
    $region5: #{tpu_custom_call.1} parent=1 // pred_fallthru
      _
    // Predicated region
    $region6: #{tpu_custom_call.1} parent=1 // pred_check
      _
    $region7: #{tpu_custom_call.1} parent=1 // pred_check_branch
      %15 = sbr.rel (0) target = $region9
    $region8: #{tpu_custom_call.1} parent=1 // pred_region
      _
    $region9: #{tpu_custom_call.1} parent=1 // pred_fallthru
      _
    // Predicated region
    $region10: #{tpu_custom_call.1} parent=1 // pred_check
      _
    $region11: #{tpu_custom_call.1} parent=1 // pred_check_branch
      %17 = sbr.rel (0) target = $region13
    $region12: #{tpu_custom_call.1} parent=1 // pred_region
      %s19 = ssub.s32 512, 512
      %20 = vsyncadd [#allocation3], %s19
      %s21 = sshll.u32 [#allocation2], 4
      %s22 = int_to_ptr.vmem [resolvable:$true] %s21
      %27 = dma.hbm_to_vmem [thread:$0]  %s2, 512, %s22, [#allocation3], 128, 128, 8
    $region13: #{tpu_custom_call.1} parent=1 // pred_fallthru
      _
    // Predicated region
    $region14: #{tpu_custom_call.1} parent=1 // pred_check
      _
    $region15: #{tpu_custom_call.1} parent=1 // pred_check_branch
      %29 = sbr.rel (0) target = $region17
    $region16: #{tpu_custom_call.1} parent=1 // pred_region
      _
    $region17: #{tpu_custom_call.1} parent=1 // pred_fallthru
      _
    // Predicated region
    $region18: #{tpu_custom_call.1} parent=1 // pred_check
      _
    $region19: #{tpu_custom_call.1} parent=1 // pred_check_branch
      %31 = sbr.rel (0) target = $region21
    $region20: #{tpu_custom_call.1} parent=1 // pred_region
      _
    $region21: #{tpu_custom_call.1} parent=1 // pred_fallthru
      _
    // Predicated region
    $region22: #{tpu_custom_call.1} parent=1 // pred_check
      _
    $region23: #{tpu_custom_call.1} parent=1 // pred_check_branch
      %33 = sbr.rel (0) target = $region25
    $region24: #{tpu_custom_call.1} parent=1 // pred_region
      %34 = dma.done [#allocation3], 512
    $region25: #{tpu_custom_call.1} parent=1 // pred_fallthru
      _
    %v37 = vld [vmem:[#allocation2] sm:$0xff]
    %v38 = vld [vmem:[#allocation2 + $0x8] sm:$0xff]
    %v39 = vld [vmem:[#allocation2 + $0x10] sm:$0xff]
    %v40 = vld [vmem:[#allocation2 + $0x18] sm:$0xff]
    %vm41 = vnez %v37
    %vm42 = vnez %v38
    %vm43 = vnez %v39
    %vm44 = vnez %v40
    %v45 = vld [vmem:[%s0] sm:$0xff]
    %v46 = vld [vmem:[%s0 + $0x8] sm:$0xff]
    %v47 = vld [vmem:[%s0 + $0x10] sm:$0xff]
    %v48 = vld [vmem:[%s0 + $0x18] sm:$0xff]
    %v49 = vld [vmem:[%s0 + $0x20] sm:$0xff]
    %v50 = vld [vmem:[%s0 + $0x28] sm:$0xff]
    %v51 = vld [vmem:[%s0 + $0x30] sm:$0xff]
    %v52 = vld [vmem:[%s0 + $0x38] sm:$0xff]
    %v53 = vld [vmem:[%s0 + $0x40] sm:$0xff]
    %v54 = vld [vmem:[%s0 + $0x48] sm:$0xff]
    %v55 = vld [vmem:[%s0 + $0x50] sm:$0xff]
    %v56 = vld [vmem:[%s0 + $0x58] sm:$0xff]
    %v57 = vld [vmem:[%s0 + $0x60] sm:$0xff]
    %v58 = vld [vmem:[%s0 + $0x68] sm:$0xff]
    %v59 = vld [vmem:[%s0 + $0x70] sm:$0xff]
    %v60 = vld [vmem:[%s0 + $0x78] sm:$0xff]
    %v61 = vld [vmem:[%s1] sm:$0xff]
    %v62 = vld [vmem:[%s1 + $0x8] sm:$0xff]
    %v63 = vld [vmem:[%s1 + $0x10] sm:$0xff]
    %v64 = vld [vmem:[%s1 + $0x18] sm:$0xff]
    %vm65 = vcmask 261120
    %v67 = vsel %vm65, %v45, 0
    %v70 = vsel %vm65, %v46, 0
    %v73 = vsel %vm65, %v47, 0
    %v76 = vsel %vm65, %v48, 0
    %v79 = vsel %vm65, %v49, 0
    %v82 = vsel %vm65, %v50, 0
    %v85 = vsel %vm65, %v51, 0
    %v88 = vsel %vm65, %v52, 0
    %v91 = vsel %vm65, %v53, 0
    %v94 = vsel %vm65, %v54, 0
    %v97 = vsel %vm65, %v55, 0
    %v100 = vsel %vm65, %v56, 0
    %v103 = vsel %vm65, %v57, 0
    %v106 = vsel %vm65, %v58, 0
    %v109 = vsel %vm65, %v59, 0
    %v112 = vsel %vm65, %v60, 0
    %114 = vmatprep.subr.mxu0 0.0
    %115 = vmatpush1.msra.mxu0 %v61
    %116 = vmatprep.subr.mxu0 0.0
    %117 = vmatpush1.msra.mxu0 %v62
    %118 = vmatprep.subr.mxu0 0.0
    %119 = vmatpush1.msra.mxu0 %v63
    %120 = vmatprep.subr.mxu0 0.0
    %121 = vmatpush1.msra.mxu0 %v64
    %122 = vmatprep.subr.mxu0 0.0
    %123 = vmatpush1.msra.mxu0 0.0
    %124 = vmatprep.subr.mxu0 0.0
    %125 = vmatpush1.msra.mxu0 0.0
    %126 = vmatprep.subr.mxu0 0.0
    %127 = vmatpush1.msra.mxu0 0.0
    %128 = vmatprep.subr.mxu0 0.0
    %129 = vmatpush1.msra.mxu0 0.0
    %130 = vmatprep.subr.mxu0 0.0
    %131 = vmatpush1.msra.mxu0 0.0
    %132 = vmatprep.subr.mxu0 0.0
    %133 = vmatpush1.msra.mxu0 0.0
    %134 = vmatprep.subr.mxu0 0.0
    %135 = vmatpush1.msra.mxu0 0.0
    %136 = vmatprep.subr.mxu0 0.0
    %137 = vmatpush1.msra.mxu0 0.0
    %138 = vmatprep.subr.mxu0 0.0
    %139 = vmatpush1.msra.mxu0 0.0
    %140 = vmatprep.subr.mxu0 0.0
    %141 = vmatpush1.msra.mxu0 0.0
    %142 = vmatprep.subr.mxu0 0.0
    %143 = vmatpush1.msra.mxu0 0.0
    %144 = vmatprep.subr.mxu0 0.0
    %145 = vmatpush1.msra.mxu0 0.0
    %146 = vmatprep.subr.mxu0 0.0
    %147 = vmatpush1.msra.mxu0 0.0
    %148 = vmatprep.subr.mxu0 0.0
    %149 = vmatpush1.msra.mxu0 0.0
    %150 = vmatprep.subr.mxu0 0.0
    %151 = vmatpush1.msra.mxu0 0.0
    %152 = vmatprep.subr.mxu0 0.0
    %153 = vmatpush1.msra.mxu0 0.0
    %154 = vmatprep.subr.mxu0 0.0
    %155 = vmatpush1.msra.mxu0 0.0
    %156 = vmatprep.subr.mxu0 0.0
    %157 = vmatpush1.msra.mxu0 0.0
    %158 = vmatprep.subr.mxu0 0.0
    %159 = vmatpush1.msra.mxu0 0.0
    %160 = vmatprep.subr.mxu0 0.0
    %161 = vmatpush1.msra.mxu0 0.0
    %162 = vmatprep.subr.mxu0 0.0
    %163 = vmatpush1.msra.mxu0 0.0
    %164 = vmatprep.subr.mxu0 0.0
    %165 = vmatpush1.msra.mxu0 0.0
    %166 = vmatprep.subr.mxu0 0.0
    %167 = vmatpush1.msra.mxu0 0.0
    %168 = vmatprep.subr.mxu0 0.0
    %169 = vmatpush1.msra.mxu0 0.0
    %170 = vmatprep.subr.mxu0 0.0
    %171 = vmatpush1.msra.mxu0 0.0
    %172 = vmatprep.subr.mxu0 0.0
    %173 = vmatpush1.msra.mxu0 0.0
    %174 = vmatprep.subr.mxu0 0.0
    %175 = vmatpush1.msra.mxu0 0.0
    %176 = vmatprep.subr.mxu0 0.0
    %177 = vmatpush1.msra.mxu0 0.0
    %178 = vmatprep.mubr.f32.mxu0 0.0
    %179 = vmatmul.mubr.f32.gmra.mrb[0].mxu0 %v67
    %v180 = vpop.f32.mrb[0].mxu0
    %v181 = vadd.f32 0.0, %v180
    %v182 = vpop.f32.mrb[0].mxu0
    %183 = vmatprep.mubr.f32.mxu0 0.0
    %184 = vmatmul.mubr.f32.gmra.mrb[0].mxu0 %v70
    %v185 = vpop.f32.mrb[0].mxu0
    %v186 = vadd.f32 0.0, %v185
    %v187 = vpop.f32.mrb[0].mxu0
    %188 = vmatprep.mubr.f32.mxu0 0.0
    %189 = vmatmul.mubr.f32.gmra.mrb[0].mxu0 %v73
    %v190 = vpop.f32.mrb[0].mxu0
    %v191 = vadd.f32 0.0, %v190
    %v192 = vpop.f32.mrb[0].mxu0
    %193 = vmatprep.mubr.f32.mxu0 0.0
    %194 = vmatmul.mubr.f32.gmra.mrb[0].mxu0 %v76
    %v195 = vpop.f32.mrb[0].mxu0
    %v196 = vadd.f32 0.0, %v195
    %v197 = vpop.f32.mrb[0].mxu0
    %198 = vmatprep.mubr.f32.mxu0 0.0
    %199 = vmatmul.mubr.f32.gmra.mrb[0].mxu0 %v79
    %v200 = vpop.f32.mrb[0].mxu0
    %v201 = vadd.f32 0.0, %v200
    %v202 = vpop.f32.mrb[0].mxu0
    %203 = vmatprep.mubr.f32.mxu0 0.0
    %204 = vmatmul.mubr.f32.gmra.mrb[0].mxu0 %v82
    %v205 = vpop.f32.mrb[0].mxu0
    %v206 = vadd.f32 0.0, %v205
    %v207 = vpop.f32.mrb[0].mxu0
    %208 = vmatprep.mubr.f32.mxu0 0.0
    %209 = vmatmul.mubr.f32.gmra.mrb[0].mxu0 %v85
    %v210 = vpop.f32.mrb[0].mxu0
    %v211 = vadd.f32 0.0, %v210
    %v212 = vpop.f32.mrb[0].mxu0
    %213 = vmatprep.mubr.f32.mxu0 0.0
    %214 = vmatmul.mubr.f32.gmra.mrb[0].mxu0 %v88
    %v215 = vpop.f32.mrb[0].mxu0
    %v216 = vadd.f32 0.0, %v215
    %v217 = vpop.f32.mrb[0].mxu0
    %218 = vmatprep.mubr.f32.mxu0 0.0
    %219 = vmatmul.mubr.f32.gmra.mrb[0].mxu0 %v91
    %v220 = vpop.f32.mrb[0].mxu0
    %v221 = vadd.f32 0.0, %v220
    %v222 = vpop.f32.mrb[0].mxu0
    %223 = vmatprep.mubr.f32.mxu0 0.0
    %224 = vmatmul.mubr.f32.gmra.mrb[0].mxu0 %v94
    %v225 = vpop.f32.mrb[0].mxu0
    %v226 = vadd.f32 0.0, %v225
    %v227 = vpop.f32.mrb[0].mxu0
    %228 = vmatprep.mubr.f32.mxu0 0.0
    %229 = vmatmul.mubr.f32.gmra.mrb[0].mxu0 %v97
    %v230 = vpop.f32.mrb[0].mxu0
    %v231 = vadd.f32 0.0, %v230
    %v232 = vpop.f32.mrb[0].mxu0
    %233 = vmatprep.mubr.f32.mxu0 0.0
    %234 = vmatmul.mubr.f32.gmra.mrb[0].mxu0 %v100
    %v235 = vpop.f32.mrb[0].mxu0
    %v236 = vadd.f32 0.0, %v235
    %v237 = vpop.f32.mrb[0].mxu0
    %238 = vmatprep.mubr.f32.mxu0 0.0
    %239 = vmatmul.mubr.f32.gmra.mrb[0].mxu0 %v103
    %v240 = vpop.f32.mrb[0].mxu0
    %v241 = vadd.f32 0.0, %v240
    %v242 = vpop.f32.mrb[0].mxu0
    %243 = vmatprep.mubr.f32.mxu0 0.0
    %244 = vmatmul.mubr.f32.gmra.mrb[0].mxu0 %v106
    %v245 = vpop.f32.mrb[0].mxu0
    %v246 = vadd.f32 0.0, %v245
    %v247 = vpop.f32.mrb[0].mxu0
    %248 = vmatprep.mubr.f32.mxu0 0.0
    %249 = vmatmul.mubr.f32.gmra.mrb[0].mxu0 %v109
    %v250 = vpop.f32.mrb[0].mxu0
    %v251 = vadd.f32 0.0, %v250
    %v252 = vpop.f32.mrb[0].mxu0
    %253 = vmatprep.mubr.f32.mxu0 0.0
    %254 = vmatmul.mubr.f32.gmra.mrb[0].mxu0 %v112
    %v255 = vpop.f32.mrb[0].mxu0
    %v256 = vadd.f32 0.0, %v255
    %v257 = vpop.f32.mrb[0].mxu0
    %258 = vdwg.mxu0
    %v259 = vld [vmem:[%s4] sm:$0xff]
    %v260 = vld [vmem:[%s4 + $0x8] sm:$0xff]
    %v261 = vld [vmem:[%s4 + $0x10] sm:$0xff]
    %v262 = vld [vmem:[%s4 + $0x18] sm:$0xff]
    %v263 = vld [vmem:[%s4 + $0x20] sm:$0xff]
    %v264 = vld [vmem:[%s4 + $0x28] sm:$0xff]
    %v265 = vld [vmem:[%s4 + $0x30] sm:$0xff]
    %v266 = vld [vmem:[%s4 + $0x38] sm:$0xff]
    %v267 = vld [vmem:[%s4 + $0x40] sm:$0xff]
    %v268 = vld [vmem:[%s4 + $0x48] sm:$0xff]
    %v269 = vld [vmem:[%s4 + $0x50] sm:$0xff]
    %v270 = vld [vmem:[%s4 + $0x58] sm:$0xff]
    %v271 = vld [vmem:[%s4 + $0x60] sm:$0xff]
    %v272 = vld [vmem:[%s4 + $0x68] sm:$0xff]
    %v273 = vld [vmem:[%s4 + $0x70] sm:$0xff]
    %v274 = vld [vmem:[%s4 + $0x78] sm:$0xff]
    %v275 = vmul.f32 %v181, %v259
    %v276 = vmul.f32 %v186, %v260
    %v277 = vmul.f32 %v191, %v261
    %v278 = vmul.f32 %v196, %v262
    %v279 = vmul.f32 %v201, %v263
    %v280 = vmul.f32 %v206, %v264
    %v281 = vmul.f32 %v211, %v265
    %v282 = vmul.f32 %v216, %v266
    %v283 = vmul.f32 %v221, %v267
    %v284 = vmul.f32 %v226, %v268
    %v285 = vmul.f32 %v231, %v269
    %v286 = vmul.f32 %v236, %v270
    %v287 = vmul.f32 %v241, %v271
    %v288 = vmul.f32 %v246, %v272
    %v289 = vmul.f32 %v251, %v273
    %v290 = vmul.f32 %v256, %v274
    %v291 = vmul.f32 %v275, 0.5
    %v292 = vmul.f32 %v276, 0.5
    %v293 = vmul.f32 %v277, 0.5
    %v294 = vmul.f32 %v278, 0.5
    %v295 = vmul.f32 %v279, 0.5
    %v296 = vmul.f32 %v280, 0.5
    %v297 = vmul.f32 %v281, 0.5
    %v298 = vmul.f32 %v282, 0.5
    %v299 = vmul.f32 %v283, 0.5
    %v300 = vmul.f32 %v284, 0.5
    %v301 = vmul.f32 %v285, 0.5
    %v302 = vmul.f32 %v286, 0.5
    %v303 = vmul.f32 %v287, 0.5
    %v304 = vmul.f32 %v288, 0.5
    %v305 = vmul.f32 %v289, 0.5
    %v306 = vmul.f32 %v290, 0.5
    %v307 = vtanh.pop %v291
    %v308 = vtanh.pop %v292
    %v309 = vtanh.pop %v293
    %v310 = vtanh.pop %v294
    %v311 = vtanh.pop %v295
    %v312 = vtanh.pop %v296
    %v313 = vtanh.pop %v297
    %v314 = vtanh.pop %v298
    %v315 = vtanh.pop %v299
    %v316 = vtanh.pop %v300
    %v317 = vtanh.pop %v301
    %v318 = vtanh.pop %v302
    %v319 = vtanh.pop %v303
    %v320 = vtanh.pop %v304
    %v321 = vtanh.pop %v305
    %v322 = vtanh.pop %v306
    %v323 = vmul.f32 %v307, 0.5
    %v324 = vmul.f32 %v308, 0.5
    %v325 = vmul.f32 %v309, 0.5
    %v326 = vmul.f32 %v310, 0.5
    %v327 = vmul.f32 %v311, 0.5
    %v328 = vmul.f32 %v312, 0.5
    %v329 = vmul.f32 %v313, 0.5
    %v330 = vmul.f32 %v314, 0.5
    %v331 = vmul.f32 %v315, 0.5
    %v332 = vmul.f32 %v316, 0.5
    %v333 = vmul.f32 %v317, 0.5
    %v334 = vmul.f32 %v318, 0.5
    %v335 = vmul.f32 %v319, 0.5
    %v336 = vmul.f32 %v320, 0.5
    %v337 = vmul.f32 %v321, 0.5
    %v338 = vmul.f32 %v322, 0.5
    %v339 = vsub.f32 0.5, %v323
    %v340 = vsub.f32 0.5, %v324
    %v341 = vsub.f32 0.5, %v325
    %v342 = vsub.f32 0.5, %v326
    %v343 = vsub.f32 0.5, %v327
    %v344 = vsub.f32 0.5, %v328
    %v345 = vsub.f32 0.5, %v329
    %v346 = vsub.f32 0.5, %v330
    %v347 = vsub.f32 0.5, %v331
    %v348 = vsub.f32 0.5, %v332
    %v349 = vsub.f32 0.5, %v333
    %v350 = vsub.f32 0.5, %v334
    %v351 = vsub.f32 0.5, %v335
    %v352 = vsub.f32 0.5, %v336
    %v353 = vsub.f32 0.5, %v337
    %v354 = vsub.f32 0.5, %v338
    %v355 = vld [vmem:[%s3] sm:$0x1]
    %vm356 = vnez %v355
    %v357 = vsel %vm356, 16843009, 0
    %v358 = vunpack.c.0.s8 %v357
    %vm359 = vcmp.ne.s32.totalorder %v358, 0
    %v360 = vsel %vm359, 1, 0
    %v361 = vlaneseq
    %v362 = vshrl.u32 %v361, 7
    %v363 = vsub.s32 0, %v362
    %v364 = vrot.slane %v360, %v363
    %vm365 = vcmp.eq.s32.totalorder %v364, 1
    %vm366 = vmpackc.low %vm365, %vm365
    %vm367 = vmpackc.even %vm366, %vm366
    %v368 = vsel %vm367, 16843009, 0
    %v369 = vlaneseq
    %v370 = vshrl.u32 %v369, 7
    %v371 = vsub.s32 0, %v370
    %v372 = vrot.slane %v368, %v371
    %vm373 = vnez %v372
    %vm374 = vmor %vm41, %vm373
    %vm375 = vmor %vm42, %vm373
    %vm376 = vmor %vm43, %vm373
    %vm377 = vmor %vm44, %vm373
    %v378 = vmul.f32 %v339, 1.442695
    %v379 = vpow.pop %v378
    %v380 = vmul.f32 %v340, 1.442695
    %v381 = vpow.pop %v380
    %v382 = vmul.f32 %v341, 1.442695
    %v383 = vpow.pop %v382
    %v384 = vmul.f32 %v342, 1.442695
    %v385 = vpow.pop %v384
    %v386 = vmul.f32 %v343, 1.442695
    %v387 = vpow.pop %v386
    %v388 = vmul.f32 %v344, 1.442695
    %v389 = vpow.pop %v388
    %v390 = vmul.f32 %v345, 1.442695
    %v391 = vpow.pop %v390
    %v392 = vmul.f32 %v346, 1.442695
    %v393 = vpow.pop %v392
    %v394 = vmul.f32 %v347, 1.442695
    %v395 = vpow.pop %v394
    %v396 = vmul.f32 %v348, 1.442695
    %v397 = vpow.pop %v396
    %v398 = vmul.f32 %v349, 1.442695
    %v399 = vpow.pop %v398
    %v400 = vmul.f32 %v350, 1.442695
    %v401 = vpow.pop %v400
    %v402 = vmul.f32 %v351, 1.442695
    %v403 = vpow.pop %v402
    %v404 = vmul.f32 %v352, 1.442695
    %v405 = vpow.pop %v404
    %v406 = vmul.f32 %v353, 1.442695
    %v407 = vpow.pop %v406
    %v408 = vmul.f32 %v354, 1.442695
    %v409 = vpow.pop %v408
    %v410 = vsel %vm374, 16843009, 0
    %v411 = vsel %vm375, 16843009, 0
    %v412 = vsel %vm376, 16843009, 0
    %v413 = vsel %vm377, 16843009, 0
    %v414 = vunpack.c.0.s8 %v410
    %v415 = vunpack.c.1.s8 %v410
    %v416 = vunpack.c.2.s8 %v410
    %v417 = vunpack.c.3.s8 %v410
    %v418 = vunpack.c.0.s8 %v411
    %v419 = vunpack.c.1.s8 %v411
    %v420 = vunpack.c.2.s8 %v411
    %v421 = vunpack.c.3.s8 %v411
    %v422 = vunpack.c.0.s8 %v412
    %v423 = vunpack.c.1.s8 %v412
    %v424 = vunpack.c.2.s8 %v412
    %v425 = vunpack.c.3.s8 %v412
    %v426 = vunpack.c.0.s8 %v413
    %v427 = vunpack.c.1.s8 %v413
    %v428 = vunpack.c.2.s8 %v413
    %v429 = vunpack.c.3.s8 %v413
    %v430 = vpack.c.b16 %v414, %v414
    %v431 = vpack.c.b8 %v430, %v430
    %v432 = vpack.c.b16 %v415, %v415
    %v433 = vpack.c.b8 %v432, %v432
    %v434 = vpack.c.b16 %v416, %v416
    %v435 = vpack.c.b8 %v434, %v434
    %v436 = vpack.c.b16 %v417, %v417
    %v437 = vpack.c.b8 %v436, %v436
    %v438 = vpack.c.b16 %v418, %v418
    %v439 = vpack.c.b8 %v438, %v438
    %v440 = vpack.c.b16 %v419, %v419
    %v441 = vpack.c.b8 %v440, %v440
    %v442 = vpack.c.b16 %v420, %v420
    %v443 = vpack.c.b8 %v442, %v442
    %v444 = vpack.c.b16 %v421, %v421
    %v445 = vpack.c.b8 %v444, %v444
    %v446 = vpack.c.b16 %v422, %v422
    %v447 = vpack.c.b8 %v446, %v446
    %v448 = vpack.c.b16 %v423, %v423
    %v449 = vpack.c.b8 %v448, %v448
    %v450 = vpack.c.b16 %v424, %v424
    %v451 = vpack.c.b8 %v450, %v450
    %v452 = vpack.c.b16 %v425, %v425
    %v453 = vpack.c.b8 %v452, %v452
    %v454 = vpack.c.b16 %v426, %v426
    %v455 = vpack.c.b8 %v454, %v454
    %v456 = vpack.c.b16 %v427, %v427
    %v457 = vpack.c.b8 %v456, %v456
    %v458 = vpack.c.b16 %v428, %v428
    %v459 = vpack.c.b8 %v458, %v458
    %v460 = vpack.c.b16 %v429, %v429
    %v461 = vpack.c.b8 %v460, %v460
    %vm462 = vnez %v431
    %vm463 = vnez %v433
    %vm464 = vnez %v435
    %vm465 = vnez %v437
    %vm466 = vnez %v439
    %vm467 = vnez %v441
    %vm468 = vnez %v443
    %vm469 = vnez %v445
    %vm470 = vnez %v447
    %vm471 = vnez %v449
    %vm472 = vnez %v451
    %vm473 = vnez %v453
    %vm474 = vnez %v455
    %vm475 = vnez %v457
    %vm476 = vnez %v459
    %vm477 = vnez %v461
    %v478 = vsel %vm462, 16843009, 0
    %v479 = vsel %vm463, 16843009, 0
    %v480 = vsel %vm464, 16843009, 0
    %v481 = vsel %vm465, 16843009, 0
    %v482 = vsel %vm466, 16843009, 0
    %v483 = vsel %vm467, 16843009, 0
    %v484 = vsel %vm468, 16843009, 0
    %v485 = vsel %vm469, 16843009, 0
    %v486 = vsel %vm470, 16843009, 0
    %v487 = vsel %vm471, 16843009, 0
    %v488 = vsel %vm472, 16843009, 0
    %v489 = vsel %vm473, 16843009, 0
    %v490 = vsel %vm474, 16843009, 0
    %v491 = vsel %vm475, 16843009, 0
    %v492 = vsel %vm476, 16843009, 0
    %v493 = vsel %vm477, 16843009, 0
    %v494 = vunpack.c.0.s8 %v478
    %v495 = vunpack.c.0.s8 %v479
    %v496 = vunpack.c.0.s8 %v480
    %v497 = vunpack.c.0.s8 %v481
    %v498 = vunpack.c.0.s8 %v482
    %v499 = vunpack.c.0.s8 %v483
    %v500 = vunpack.c.0.s8 %v484
    %v501 = vunpack.c.0.s8 %v485
    %v502 = vunpack.c.0.s8 %v486
    %v503 = vunpack.c.0.s8 %v487
    %v504 = vunpack.c.0.s8 %v488
    %v505 = vunpack.c.0.s8 %v489
    %v506 = vunpack.c.0.s8 %v490
    %v507 = vunpack.c.0.s8 %v491
    %v508 = vunpack.c.0.s8 %v492
    %v509 = vunpack.c.0.s8 %v493
    %vm510 = vcmp.ne.s32.totalorder %v494, 0
    %vm511 = vcmp.ne.s32.totalorder %v495, 0
    %vm512 = vcmp.ne.s32.totalorder %v496, 0
    %vm513 = vcmp.ne.s32.totalorder %v497, 0
    %vm514 = vcmp.ne.s32.totalorder %v498, 0
    %vm515 = vcmp.ne.s32.totalorder %v499, 0
    %vm516 = vcmp.ne.s32.totalorder %v500, 0
    %vm517 = vcmp.ne.s32.totalorder %v501, 0
    %vm518 = vcmp.ne.s32.totalorder %v502, 0
    %vm519 = vcmp.ne.s32.totalorder %v503, 0
    %vm520 = vcmp.ne.s32.totalorder %v504, 0
    %vm521 = vcmp.ne.s32.totalorder %v505, 0
    %vm522 = vcmp.ne.s32.totalorder %v506, 0
    %vm523 = vcmp.ne.s32.totalorder %v507, 0
    %vm524 = vcmp.ne.s32.totalorder %v508, 0
    %vm525 = vcmp.ne.s32.totalorder %v509, 0
    %v526 = vsel %vm510, 0.0, %v379
    %v527 = vsel %vm511, 0.0, %v381
    %v528 = vsel %vm512, 0.0, %v383
    %v529 = vsel %vm513, 0.0, %v385
    %v530 = vsel %vm514, 0.0, %v387
    %v531 = vsel %vm515, 0.0, %v389
    %v532 = vsel %vm516, 0.0, %v391
    %v533 = vsel %vm517, 0.0, %v393
    %v534 = vsel %vm518, 0.0, %v395
    %v535 = vsel %vm519, 0.0, %v397
    %v536 = vsel %vm520, 0.0, %v399
    %v537 = vsel %vm521, 0.0, %v401
    %v538 = vsel %vm522, 0.0, %v403
    %v539 = vsel %vm523, 0.0, %v405
    %v540 = vsel %vm524, 0.0, %v407
    %v541 = vsel %vm525, 0.0, %v409
    %542 = vadd.xlane.f32.xlu0 %v526
    %v543 = vpop.xlane.xlu0 %542
    %544 = vadd.xlane.f32.xlu0 %v527
    %v545 = vpop.xlane.xlu0 %544
    %546 = vadd.xlane.f32.xlu0 %v528
    %v547 = vpop.xlane.xlu0 %546
    %548 = vadd.xlane.f32.xlu0 %v529
    %v549 = vpop.xlane.xlu0 %548
    %550 = vadd.xlane.f32.xlu0 %v530
    %v551 = vpop.xlane.xlu0 %550
    %552 = vadd.xlane.f32.xlu0 %v531
    %v553 = vpop.xlane.xlu0 %552
    %554 = vadd.xlane.f32.xlu0 %v532
    %v555 = vpop.xlane.xlu0 %554
    %556 = vadd.xlane.f32.xlu0 %v533
    %v557 = vpop.xlane.xlu0 %556
    %558 = vadd.xlane.f32.xlu0 %v534
    %v559 = vpop.xlane.xlu0 %558
    %560 = vadd.xlane.f32.xlu0 %v535
    %v561 = vpop.xlane.xlu0 %560
    %562 = vadd.xlane.f32.xlu0 %v536
    %v563 = vpop.xlane.xlu0 %562
    %564 = vadd.xlane.f32.xlu0 %v537
    %v565 = vpop.xlane.xlu0 %564
    %566 = vadd.xlane.f32.xlu0 %v538
    %v567 = vpop.xlane.xlu0 %566
    %568 = vadd.xlane.f32.xlu0 %v539
    %v569 = vpop.xlane.xlu0 %568
    %570 = vadd.xlane.f32.xlu0 %v540
    %v571 = vpop.xlane.xlu0 %570
    %572 = vadd.xlane.f32.xlu0 %v541
    %v573 = vpop.xlane.xlu0 %572
    %v574 = vrcp.pop %v543
    %v575 = vrcp.pop %v545
    %v576 = vrcp.pop %v547
    %v577 = vrcp.pop %v549
    %v578 = vrcp.pop %v551
    %v579 = vrcp.pop %v553
    %v580 = vrcp.pop %v555
    %v581 = vrcp.pop %v557
    %v582 = vrcp.pop %v559
    %v583 = vrcp.pop %v561
    %v584 = vrcp.pop %v563
    %v585 = vrcp.pop %v565
    %v586 = vrcp.pop %v567
    %v587 = vrcp.pop %v569
    %v588 = vrcp.pop %v571
    %v589 = vrcp.pop %v573
    %v590 = vmul.f32 %v526, %v574
    %v591 = vmul.f32 %v527, %v575
    %v592 = vmul.f32 %v528, %v576
    %v593 = vmul.f32 %v529, %v577
    %v594 = vmul.f32 %v530, %v578
    %v595 = vmul.f32 %v531, %v579
    %v596 = vmul.f32 %v532, %v580
    %v597 = vmul.f32 %v533, %v581
    %v598 = vmul.f32 %v534, %v582
    %v599 = vmul.f32 %v535, %v583
    %v600 = vmul.f32 %v536, %v584
    %v601 = vmul.f32 %v537, %v585
    %v602 = vmul.f32 %v538, %v586
    %v603 = vmul.f32 %v539, %v587
    %v604 = vmul.f32 %v540, %v588
    %v605 = vmul.f32 %v541, %v589
    %606 = vst [vmem:[#allocation5] sm:$0xff] %v590
    %607 = vst [vmem:[#allocation5 + $0x8] sm:$0xff] %v591
    %608 = vst [vmem:[#allocation5 + $0x10] sm:$0xff] %v592
    %609 = vst [vmem:[#allocation5 + $0x18] sm:$0xff] %v593
    %610 = vst [vmem:[#allocation5 + $0x20] sm:$0xff] %v594
    %611 = vst [vmem:[#allocation5 + $0x28] sm:$0xff] %v595
    %612 = vst [vmem:[#allocation5 + $0x30] sm:$0xff] %v596
    %613 = vst [vmem:[#allocation5 + $0x38] sm:$0xff] %v597
    %614 = vst [vmem:[#allocation5 + $0x40] sm:$0xff] %v598
    %615 = vst [vmem:[#allocation5 + $0x48] sm:$0xff] %v599
    %616 = vst [vmem:[#allocation5 + $0x50] sm:$0xff] %v600
    %617 = vst [vmem:[#allocation5 + $0x58] sm:$0xff] %v601
    %618 = vst [vmem:[#allocation5 + $0x60] sm:$0xff] %v602
    %619 = vst [vmem:[#allocation5 + $0x68] sm:$0xff] %v603
    %620 = vst [vmem:[#allocation5 + $0x70] sm:$0xff] %v604
    %621 = vst [vmem:[#allocation5 + $0x78] sm:$0xff] %v605
    %s622 = scalar_lea.vmem %s0, 128
    %v623 = vld [vmem:[%s622] sm:$0xff]
    %v624 = vld [vmem:[%s622 + $0x8] sm:$0xff]
    %v625 = vld [vmem:[%s622 + $0x10] sm:$0xff]
    %v626 = vld [vmem:[%s622 + $0x18] sm:$0xff]
    %v627 = vld [vmem:[%s622 + $0x20] sm:$0xff]
    %v628 = vld [vmem:[%s622 + $0x28] sm:$0xff]
    %v629 = vld [vmem:[%s622 + $0x30] sm:$0xff]
    %v630 = vld [vmem:[%s622 + $0x38] sm:$0xff]
    %v631 = vld [vmem:[%s622 + $0x40] sm:$0xff]
    %v632 = vld [vmem:[%s622 + $0x48] sm:$0xff]
    %v633 = vld [vmem:[%s622 + $0x50] sm:$0xff]
    %v634 = vld [vmem:[%s622 + $0x58] sm:$0xff]
    %v635 = vld [vmem:[%s622 + $0x60] sm:$0xff]
    %v636 = vld [vmem:[%s622 + $0x68] sm:$0xff]
    %v637 = vld [vmem:[%s622 + $0x70] sm:$0xff]
    %v638 = vld [vmem:[%s622 + $0x78] sm:$0xff]
    %s639 = scalar_lea.vmem %s1, 32
    %v640 = vld [vmem:[%s639] sm:$0xff]
    %v641 = vld [vmem:[%s639 + $0x8] sm:$0xff]
    %v642 = vld [vmem:[%s639 + $0x10] sm:$0xff]
    %v643 = vld [vmem:[%s639 + $0x18] sm:$0xff]
    %v645 = vsel %vm65, %v623, 0
    %v648 = vsel %vm65, %v624, 0
    %v651 = vsel %vm65, %v625, 0
    %v654 = vsel %vm65, %v626, 0
    %v657 = vsel %vm65, %v627, 0
    %v660 = vsel %vm65, %v628, 0
    %v663 = vsel %vm65, %v629, 0
    %v666 = vsel %vm65, %v630, 0
    %v669 = vsel %vm65, %v631, 0
    %v672 = vsel %vm65, %v632, 0
    %v675 = vsel %vm65, %v633, 0
    %v678 = vsel %vm65, %v634, 0
    %v681 = vsel %vm65, %v635, 0
    %v684 = vsel %vm65, %v636, 0
    %v687 = vsel %vm65, %v637, 0
    %v690 = vsel %vm65, %v638, 0
    %692 = vmatprep.subr.mxu0 0.0
    %693 = vmatpush1.msra.mxu0 %v640
    %694 = vmatprep.subr.mxu0 0.0
    %695 = vmatpush1.msra.mxu0 %v641
    %696 = vmatprep.subr.mxu0 0.0
    %697 = vmatpush1.msra.mxu0 %v642
    %698 = vmatprep.subr.mxu0 0.0
    %699 = vmatpush1.msra.mxu0 %v643
    %700 = vmatprep.subr.mxu0 0.0
    %701 = vmatpush1.msra.mxu0 0.0
    %702 = vmatprep.subr.mxu0 0.0
    %703 = vmatpush1.msra.mxu0 0.0
    %704 = vmatprep.subr.mxu0 0.0
    %705 = vmatpush1.msra.mxu0 0.0
    %706 = vmatprep.subr.mxu0 0.0
    %707 = vmatpush1.msra.mxu0 0.0
    %708 = vmatprep.subr.mxu0 0.0
    %709 = vmatpush1.msra.mxu0 0.0
    %710 = vmatprep.subr.mxu0 0.0
    %711 = vmatpush1.msra.mxu0 0.0
    %712 = vmatprep.subr.mxu0 0.0
    %713 = vmatpush1.msra.mxu0 0.0
    %714 = vmatprep.subr.mxu0 0.0
    %715 = vmatpush1.msra.mxu0 0.0
    %716 = vmatprep.subr.mxu0 0.0
    %717 = vmatpush1.msra.mxu0 0.0
    %718 = vmatprep.subr.mxu0 0.0
    %719 = vmatpush1.msra.mxu0 0.0
    %720 = vmatprep.subr.mxu0 0.0
    %721 = vmatpush1.msra.mxu0 0.0
    %722 = vmatprep.subr.mxu0 0.0
    %723 = vmatpush1.msra.mxu0 0.0
    %724 = vmatprep.subr.mxu0 0.0
    %725 = vmatpush1.msra.mxu0 0.0
    %726 = vmatprep.subr.mxu0 0.0
    %727 = vmatpush1.msra.mxu0 0.0
    %728 = vmatprep.subr.mxu0 0.0
    %729 = vmatpush1.msra.mxu0 0.0
    %730 = vmatprep.subr.mxu0 0.0
    %731 = vmatpush1.msra.mxu0 0.0
    %732 = vmatprep.subr.mxu0 0.0
    %733 = vmatpush1.msra.mxu0 0.0
    %734 = vmatprep.subr.mxu0 0.0
    %735 = vmatpush1.msra.mxu0 0.0
    %736 = vmatprep.subr.mxu0 0.0
    %737 = vmatpush1.msra.mxu0 0.0
    %738 = vmatprep.subr.mxu0 0.0
    %739 = vmatpush1.msra.mxu0 0.0
    %740 = vmatprep.subr.mxu0 0.0
    %741 = vmatpush1.msra.mxu0 0.0
    %742 = vmatprep.subr.mxu0 0.0
    %743 = vmatpush1.msra.mxu0 0.0
    %744 = vmatprep.subr.mxu0 0.0
    %745 = vmatpush1.msra.mxu0 0.0
    %746 = vmatprep.subr.mxu0 0.0
    %747 = vmatpush1.msra.mxu0 0.0
    %748 = vmatprep.subr.mxu0 0.0
    %749 = vmatpush1.msra.mxu0 0.0
    %750 = vmatprep.subr.mxu0 0.0
    %751 = vmatpush1.msra.mxu0 0.0
    %752 = vmatprep.subr.mxu0 0.0
    %753 = vmatpush1.msra.mxu0 0.0
    %754 = vmatprep.subr.mxu0 0.0
    %755 = vmatpush1.msra.mxu0 0.0
    %756 = vmatprep.mubr.f32.mxu0 0.0
    %757 = vmatmul.mubr.f32.gmra.mrb[0].mxu0 %v645
    %v758 = vpop.f32.mrb[0].mxu0
    %v759 = vadd.f32 0.0, %v758
    %v760 = vpop.f32.mrb[0].mxu0
    %761 = vmatprep.mubr.f32.mxu0 0.0
    %762 = vmatmul.mubr.f32.gmra.mrb[0].mxu0 %v648
    %v763 = vpop.f32.mrb[0].mxu0
    %v764 = vadd.f32 0.0, %v763
    %v765 = vpop.f32.mrb[0].mxu0
    %766 = vmatprep.mubr.f32.mxu0 0.0
    %767 = vmatmul.mubr.f32.gmra.mrb[0].mxu0 %v651
    %v768 = vpop.f32.mrb[0].mxu0
    %v769 = vadd.f32 0.0, %v768
    %v770 = vpop.f32.mrb[0].mxu0
    %771 = vmatprep.mubr.f32.mxu0 0.0
    %772 = vmatmul.mubr.f32.gmra.mrb[0].mxu0 %v654
    %v773 = vpop.f32.mrb[0].mxu0
    %v774 = vadd.f32 0.0, %v773
    %v775 = vpop.f32.mrb[0].mxu0
    %776 = vmatprep.mubr.f32.mxu0 0.0
    %777 = vmatmul.mubr.f32.gmra.mrb[0].mxu0 %v657
    %v778 = vpop.f32.mrb[0].mxu0
    %v779 = vadd.f32 0.0, %v778
    %v780 = vpop.f32.mrb[0].mxu0
    %781 = vmatprep.mubr.f32.mxu0 0.0
    %782 = vmatmul.mubr.f32.gmra.mrb[0].mxu0 %v660
    %v783 = vpop.f32.mrb[0].mxu0
    %v784 = vadd.f32 0.0, %v783
    %v785 = vpop.f32.mrb[0].mxu0
    %786 = vmatprep.mubr.f32.mxu0 0.0
    %787 = vmatmul.mubr.f32.gmra.mrb[0].mxu0 %v663
    %v788 = vpop.f32.mrb[0].mxu0
    %v789 = vadd.f32 0.0, %v788
    %v790 = vpop.f32.mrb[0].mxu0
    %791 = vmatprep.mubr.f32.mxu0 0.0
    %792 = vmatmul.mubr.f32.gmra.mrb[0].mxu0 %v666
    %v793 = vpop.f32.mrb[0].mxu0
    %v794 = vadd.f32 0.0, %v793
    %v795 = vpop.f32.mrb[0].mxu0
    %796 = vmatprep.mubr.f32.mxu0 0.0
    %797 = vmatmul.mubr.f32.gmra.mrb[0].mxu0 %v669
    %v798 = vpop.f32.mrb[0].mxu0
    %v799 = vadd.f32 0.0, %v798
    %v800 = vpop.f32.mrb[0].mxu0
    %801 = vmatprep.mubr.f32.mxu0 0.0
    %802 = vmatmul.mubr.f32.gmra.mrb[0].mxu0 %v672
    %v803 = vpop.f32.mrb[0].mxu0
    %v804 = vadd.f32 0.0, %v803
    %v805 = vpop.f32.mrb[0].mxu0
    %806 = vmatprep.mubr.f32.mxu0 0.0
    %807 = vmatmul.mubr.f32.gmra.mrb[0].mxu0 %v675
    %v808 = vpop.f32.mrb[0].mxu0
    %v809 = vadd.f32 0.0, %v808
    %v810 = vpop.f32.mrb[0].mxu0
    %811 = vmatprep.mubr.f32.mxu0 0.0
    %812 = vmatmul.mubr.f32.gmra.mrb[0].mxu0 %v678
    %v813 = vpop.f32.mrb[0].mxu0
    %v814 = vadd.f32 0.0, %v813
    %v815 = vpop.f32.mrb[0].mxu0
    %816 = vmatprep.mubr.f32.mxu0 0.0
    %817 = vmatmul.mubr.f32.gmra.mrb[0].mxu0 %v681
    %v818 = vpop.f32.mrb[0].mxu0
    %v819 = vadd.f32 0.0, %v818
    %v820 = vpop.f32.mrb[0].mxu0
    %821 = vmatprep.mubr.f32.mxu0 0.0
    %822 = vmatmul.mubr.f32.gmra.mrb[0].mxu0 %v684
    %v823 = vpop.f32.mrb[0].mxu0
    %v824 = vadd.f32 0.0, %v823
    %v825 = vpop.f32.mrb[0].mxu0
    %826 = vmatprep.mubr.f32.mxu0 0.0
    %827 = vmatmul.mubr.f32.gmra.mrb[0].mxu0 %v687
    %v828 = vpop.f32.mrb[0].mxu0
    %v829 = vadd.f32 0.0, %v828
    %v830 = vpop.f32.mrb[0].mxu0
    %831 = vmatprep.mubr.f32.mxu0 0.0
    %832 = vmatmul.mubr.f32.gmra.mrb[0].mxu0 %v690
    %v833 = vpop.f32.mrb[0].mxu0
    %v834 = vadd.f32 0.0, %v833
    %v835 = vpop.f32.mrb[0].mxu0
    %836 = vdwg.mxu0
    %s837 = scalar_lea.vmem %s4, 128
    %v838 = vld [vmem:[%s837] sm:$0xff]
    %v839 = vld [vmem:[%s837 + $0x8] sm:$0xff]
    %v840 = vld [vmem:[%s837 + $0x10] sm:$0xff]
    %v841 = vld [vmem:[%s837 + $0x18] sm:$0xff]
    %v842 = vld [vmem:[%s837 + $0x20] sm:$0xff]
    %v843 = vld [vmem:[%s837 + $0x28] sm:$0xff]
    %v844 = vld [vmem:[%s837 + $0x30] sm:$0xff]
    %v845 = vld [vmem:[%s837 + $0x38] sm:$0xff]
    %v846 = vld [vmem:[%s837 + $0x40] sm:$0xff]
    %v847 = vld [vmem:[%s837 + $0x48] sm:$0xff]
    %v848 = vld [vmem:[%s837 + $0x50] sm:$0xff]
    %v849 = vld [vmem:[%s837 + $0x58] sm:$0xff]
    %v850 = vld [vmem:[%s837 + $0x60] sm:$0xff]
    %v851 = vld [vmem:[%s837 + $0x68] sm:$0xff]
    %v852 = vld [vmem:[%s837 + $0x70] sm:$0xff]
    %v853 = vld [vmem:[%s837 + $0x78] sm:$0xff]
    %v854 = vmul.f32 %v759, %v838
    %v855 = vmul.f32 %v764, %v839
    %v856 = vmul.f32 %v769, %v840
    %v857 = vmul.f32 %v774, %v841
    %v858 = vmul.f32 %v779, %v842
    %v859 = vmul.f32 %v784, %v843
    %v860 = vmul.f32 %v789, %v844
    %v861 = vmul.f32 %v794, %v845
    %v862 = vmul.f32 %v799, %v846
    %v863 = vmul.f32 %v804, %v847
    %v864 = vmul.f32 %v809, %v848
    %v865 = vmul.f32 %v814, %v849
    %v866 = vmul.f32 %v819, %v850
    %v867 = vmul.f32 %v824, %v851
    %v868 = vmul.f32 %v829, %v852
    %v869 = vmul.f32 %v834, %v853
    %v870 = vmul.f32 %v854, 0.5
    %v871 = vmul.f32 %v855, 0.5
    %v872 = vmul.f32 %v856, 0.5
    %v873 = vmul.f32 %v857, 0.5
    %v874 = vmul.f32 %v858, 0.5
    %v875 = vmul.f32 %v859, 0.5
    %v876 = vmul.f32 %v860, 0.5
    %v877 = vmul.f32 %v861, 0.5
    %v878 = vmul.f32 %v862, 0.5
    %v879 = vmul.f32 %v863, 0.5
    %v880 = vmul.f32 %v864, 0.5
    %v881 = vmul.f32 %v865, 0.5
    %v882 = vmul.f32 %v866, 0.5
    %v883 = vmul.f32 %v867, 0.5
    %v884 = vmul.f32 %v868, 0.5
    %v885 = vmul.f32 %v869, 0.5
    %v886 = vtanh.pop %v870
    %v887 = vtanh.pop %v871
    %v888 = vtanh.pop %v872
    %v889 = vtanh.pop %v873
    %v890 = vtanh.pop %v874
    %v891 = vtanh.pop %v875
    %v892 = vtanh.pop %v876
    %v893 = vtanh.pop %v877
    %v894 = vtanh.pop %v878
    %v895 = vtanh.pop %v879
    %v896 = vtanh.pop %v880
    %v897 = vtanh.pop %v881
    %v898 = vtanh.pop %v882
    %v899 = vtanh.pop %v883
    %v900 = vtanh.pop %v884
    %v901 = vtanh.pop %v885
    %v902 = vmul.f32 %v886, 0.5
    %v903 = vmul.f32 %v887, 0.5
    %v904 = vmul.f32 %v888, 0.5
    %v905 = vmul.f32 %v889, 0.5
    %v906 = vmul.f32 %v890, 0.5
    %v907 = vmul.f32 %v891, 0.5
    %v908 = vmul.f32 %v892, 0.5
    %v909 = vmul.f32 %v893, 0.5
    %v910 = vmul.f32 %v894, 0.5
    %v911 = vmul.f32 %v895, 0.5
    %v912 = vmul.f32 %v896, 0.5
    %v913 = vmul.f32 %v897, 0.5
    %v914 = vmul.f32 %v898, 0.5
    %v915 = vmul.f32 %v899, 0.5
    %v916 = vmul.f32 %v900, 0.5
    %v917 = vmul.f32 %v901, 0.5
    %v918 = vsub.f32 0.5, %v902
    %v919 = vsub.f32 0.5, %v903
    %v920 = vsub.f32 0.5, %v904
    %v921 = vsub.f32 0.5, %v905
    %v922 = vsub.f32 0.5, %v906
    %v923 = vsub.f32 0.5, %v907
    %v924 = vsub.f32 0.5, %v908
    %v925 = vsub.f32 0.5, %v909
    %v926 = vsub.f32 0.5, %v910
    %v927 = vsub.f32 0.5, %v911
    %v928 = vsub.f32 0.5, %v912
    %v929 = vsub.f32 0.5, %v913
    %v930 = vsub.f32 0.5, %v914
    %v931 = vsub.f32 0.5, %v915
    %v932 = vsub.f32 0.5, %v916
    %v933 = vsub.f32 0.5, %v917
    %s934 = scalar_lea.vmem %s3, 1
    %v935 = vld [vmem:[%s934] sm:$0x1]
    %vm936 = vnez %v935
    %v937 = vsel %vm936, 16843009, 0
    %v938 = vunpack.c.0.s8 %v937
    %vm939 = vcmp.ne.s32.totalorder %v938, 0
    %v940 = vsel %vm939, 1, 0
    %v941 = vlaneseq
    %v942 = vshrl.u32 %v941, 7
    %v943 = vsub.s32 0, %v942
    %v944 = vrot.slane %v940, %v943
    %vm945 = vcmp.eq.s32.totalorder %v944, 1
    %vm946 = vmpackc.low %vm945, %vm945
    %vm947 = vmpackc.even %vm946, %vm946
    %v948 = vsel %vm947, 16843009, 0
    %v949 = vlaneseq
    %v950 = vshrl.u32 %v949, 7
    %v951 = vsub.s32 0, %v950
    %v952 = vrot.slane %v948, %v951
    %vm953 = vnez %v952
    %vm954 = vmor %vm41, %vm953
    %vm955 = vmor %vm42, %vm953
    %vm956 = vmor %vm43, %vm953
    %vm957 = vmor %vm44, %vm953
    %v958 = vmul.f32 %v918, 1.442695
    %v959 = vpow.pop %v958
    %v960 = vmul.f32 %v919, 1.442695
    %v961 = vpow.pop %v960
    %v962 = vmul.f32 %v920, 1.442695
    %v963 = vpow.pop %v962
    %v964 = vmul.f32 %v921, 1.442695
    %v965 = vpow.pop %v964
    %v966 = vmul.f32 %v922, 1.442695
    %v967 = vpow.pop %v966
    %v968 = vmul.f32 %v923, 1.442695
    %v969 = vpow.pop %v968
    %v970 = vmul.f32 %v924, 1.442695
    %v971 = vpow.pop %v970
    %v972 = vmul.f32 %v925, 1.442695
    %v973 = vpow.pop %v972
    %v974 = vmul.f32 %v926, 1.442695
    %v975 = vpow.pop %v974
    %v976 = vmul.f32 %v927, 1.442695
    %v977 = vpow.pop %v976
    %v978 = vmul.f32 %v928, 1.442695
    %v979 = vpow.pop %v978
    %v980 = vmul.f32 %v929, 1.442695
    %v981 = vpow.pop %v980
    %v982 = vmul.f32 %v930, 1.442695
    %v983 = vpow.pop %v982
    %v984 = vmul.f32 %v931, 1.442695
    %v985 = vpow.pop %v984
    %v986 = vmul.f32 %v932, 1.442695
    %v987 = vpow.pop %v986
    %v988 = vmul.f32 %v933, 1.442695
    %v989 = vpow.pop %v988
    %v990 = vsel %vm954, 16843009, 0
    %v991 = vsel %vm955, 16843009, 0
    %v992 = vsel %vm956, 16843009, 0
    %v993 = vsel %vm957, 16843009, 0
    %v994 = vunpack.c.0.s8 %v990
    %v995 = vunpack.c.1.s8 %v990
    %v996 = vunpack.c.2.s8 %v990
    %v997 = vunpack.c.3.s8 %v990
    %v998 = vunpack.c.0.s8 %v991
    %v999 = vunpack.c.1.s8 %v991
    %v1000 = vunpack.c.2.s8 %v991
    %v1001 = vunpack.c.3.s8 %v991
    %v1002 = vunpack.c.0.s8 %v992
    %v1003 = vunpack.c.1.s8 %v992
    %v1004 = vunpack.c.2.s8 %v992
    %v1005 = vunpack.c.3.s8 %v992
    %v1006 = vunpack.c.0.s8 %v993
    %v1007 = vunpack.c.1.s8 %v993
    %v1008 = vunpack.c.2.s8 %v993
    %v1009 = vunpack.c.3.s8 %v993
    %v1010 = vpack.c.b16 %v994, %v994
    %v1011 = vpack.c.b8 %v1010, %v1010
    %v1012 = vpack.c.b16 %v995, %v995
    %v1013 = vpack.c.b8 %v1012, %v1012
    %v1014 = vpack.c.b16 %v996, %v996
    %v1015 = vpack.c.b8 %v1014, %v1014
    %v1016 = vpack.c.b16 %v997, %v997
    %v1017 = vpack.c.b8 %v1016, %v1016
    %v1018 = vpack.c.b16 %v998, %v998
    %v1019 = vpack.c.b8 %v1018, %v1018
    %v1020 = vpack.c.b16 %v999, %v999
    %v1021 = vpack.c.b8 %v1020, %v1020
    %v1022 = vpack.c.b16 %v1000, %v1000
    %v1023 = vpack.c.b8 %v1022, %v1022
    %v1024 = vpack.c.b16 %v1001, %v1001
    %v1025 = vpack.c.b8 %v1024, %v1024
    %v1026 = vpack.c.b16 %v1002, %v1002
    %v1027 = vpack.c.b8 %v1026, %v1026
    %v1028 = vpack.c.b16 %v1003, %v1003
    %v1029 = vpack.c.b8 %v1028, %v1028
    %v1030 = vpack.c.b16 %v1004, %v1004
    %v1031 = vpack.c.b8 %v1030, %v1030
    %v1032 = vpack.c.b16 %v1005, %v1005
    %v1033 = vpack.c.b8 %v1032, %v1032
    %v1034 = vpack.c.b16 %v1006, %v1006
    %v1035 = vpack.c.b8 %v1034, %v1034
    %v1036 = vpack.c.b16 %v1007, %v1007
    %v1037 = vpack.c.b8 %v1036, %v1036
    %v1038 = vpack.c.b16 %v1008, %v1008
    %v1039 = vpack.c.b8 %v1038, %v1038
    %v1040 = vpack.c.b16 %v1009, %v1009
    %v1041 = vpack.c.b8 %v1040, %v1040
    %vm1042 = vnez %v1011
    %vm1043 = vnez %v1013
    %vm1044 = vnez %v1015
    %vm1045 = vnez %v1017
    %vm1046 = vnez %v1019
    %vm1047 = vnez %v1021
    %vm1048 = vnez %v1023
    %vm1049 = vnez %v1025
    %vm1050 = vnez %v1027
    %vm1051 = vnez %v1029
    %vm1052 = vnez %v1031
    %vm1053 = vnez %v1033
    %vm1054 = vnez %v1035
    %vm1055 = vnez %v1037
    %vm1056 = vnez %v1039
    %vm1057 = vnez %v1041
    %v1058 = vsel %vm1042, 16843009, 0
    %v1059 = vsel %vm1043, 16843009, 0
    %v1060 = vsel %vm1044, 16843009, 0
    %v1061 = vsel %vm1045, 16843009, 0
    %v1062 = vsel %vm1046, 16843009, 0
    %v1063 = vsel %vm1047, 16843009, 0
    %v1064 = vsel %vm1048, 16843009, 0
    %v1065 = vsel %vm1049, 16843009, 0
    %v1066 = vsel %vm1050, 16843009, 0
    %v1067 = vsel %vm1051, 16843009, 0
    %v1068 = vsel %vm1052, 16843009, 0
    %v1069 = vsel %vm1053, 16843009, 0
    %v1070 = vsel %vm1054, 16843009, 0
    %v1071 = vsel %vm1055, 16843009, 0
    %v1072 = vsel %vm1056, 16843009, 0
    %v1073 = vsel %vm1057, 16843009, 0
    %v1074 = vunpack.c.0.s8 %v1058
    %v1075 = vunpack.c.0.s8 %v1059
    %v1076 = vunpack.c.0.s8 %v1060
    %v1077 = vunpack.c.0.s8 %v1061
    %v1078 = vunpack.c.0.s8 %v1062
    %v1079 = vunpack.c.0.s8 %v1063
    %v1080 = vunpack.c.0.s8 %v1064
    %v1081 = vunpack.c.0.s8 %v1065
    %v1082 = vunpack.c.0.s8 %v1066
    %v1083 = vunpack.c.0.s8 %v1067
    %v1084 = vunpack.c.0.s8 %v1068
    %v1085 = vunpack.c.0.s8 %v1069
    %v1086 = vunpack.c.0.s8 %v1070
    %v1087 = vunpack.c.0.s8 %v1071
    %v1088 = vunpack.c.0.s8 %v1072
    %v1089 = vunpack.c.0.s8 %v1073
    %vm1090 = vcmp.ne.s32.totalorder %v1074, 0
    %vm1091 = vcmp.ne.s32.totalorder %v1075, 0
    %vm1092 = vcmp.ne.s32.totalorder %v1076, 0
    %vm1093 = vcmp.ne.s32.totalorder %v1077, 0
    %vm1094 = vcmp.ne.s32.totalorder %v1078, 0
    %vm1095 = vcmp.ne.s32.totalorder %v1079, 0
    %vm1096 = vcmp.ne.s32.totalorder %v1080, 0
    %vm1097 = vcmp.ne.s32.totalorder %v1081, 0
    %vm1098 = vcmp.ne.s32.totalorder %v1082, 0
    %vm1099 = vcmp.ne.s32.totalorder %v1083, 0
    %vm1100 = vcmp.ne.s32.totalorder %v1084, 0
    %vm1101 = vcmp.ne.s32.totalorder %v1085, 0
    %vm1102 = vcmp.ne.s32.totalorder %v1086, 0
    %vm1103 = vcmp.ne.s32.totalorder %v1087, 0
    %vm1104 = vcmp.ne.s32.totalorder %v1088, 0
    %vm1105 = vcmp.ne.s32.totalorder %v1089, 0
    %v1106 = vsel %vm1090, 0.0, %v959
    %v1107 = vsel %vm1091, 0.0, %v961
    %v1108 = vsel %vm1092, 0.0, %v963
    %v1109 = vsel %vm1093, 0.0, %v965
    %v1110 = vsel %vm1094, 0.0, %v967
    %v1111 = vsel %vm1095, 0.0, %v969
    %v1112 = vsel %vm1096, 0.0, %v971
    %v1113 = vsel %vm1097, 0.0, %v973
    %v1114 = vsel %vm1098, 0.0, %v975
    %v1115 = vsel %vm1099, 0.0, %v977
    %v1116 = vsel %vm1100, 0.0, %v979
    %v1117 = vsel %vm1101, 0.0, %v981
    %v1118 = vsel %vm1102, 0.0, %v983
    %v1119 = vsel %vm1103, 0.0, %v985
    %v1120 = vsel %vm1104, 0.0, %v987
    %v1121 = vsel %vm1105, 0.0, %v989
    %1122 = vadd.xlane.f32.xlu0 %v1106
    %v1123 = vpop.xlane.xlu0 %1122
    %1124 = vadd.xlane.f32.xlu0 %v1107
    %v1125 = vpop.xlane.xlu0 %1124
    %1126 = vadd.xlane.f32.xlu0 %v1108
    %v1127 = vpop.xlane.xlu0 %1126
    %1128 = vadd.xlane.f32.xlu0 %v1109
    %v1129 = vpop.xlane.xlu0 %1128
    %1130 = vadd.xlane.f32.xlu0 %v1110
    %v1131 = vpop.xlane.xlu0 %1130
    %1132 = vadd.xlane.f32.xlu0 %v1111
    %v1133 = vpop.xlane.xlu0 %1132
    %1134 = vadd.xlane.f32.xlu0 %v1112
    %v1135 = vpop.xlane.xlu0 %1134
    %1136 = vadd.xlane.f32.xlu0 %v1113
    %v1137 = vpop.xlane.xlu0 %1136
    %1138 = vadd.xlane.f32.xlu0 %v1114
    %v1139 = vpop.xlane.xlu0 %1138
    %1140 = vadd.xlane.f32.xlu0 %v1115
    %v1141 = vpop.xlane.xlu0 %1140
    %1142 = vadd.xlane.f32.xlu0 %v1116
    %v1143 = vpop.xlane.xlu0 %1142
    %1144 = vadd.xlane.f32.xlu0 %v1117
    %v1145 = vpop.xlane.xlu0 %1144
    %1146 = vadd.xlane.f32.xlu0 %v1118
    %v1147 = vpop.xlane.xlu0 %1146
    %1148 = vadd.xlane.f32.xlu0 %v1119
    %v1149 = vpop.xlane.xlu0 %1148
    %1150 = vadd.xlane.f32.xlu0 %v1120
    %v1151 = vpop.xlane.xlu0 %1150
    %1152 = vadd.xlane.f32.xlu0 %v1121
    %v1153 = vpop.xlane.xlu0 %1152
    %v1154 = vrcp.pop %v1123
    %v1155 = vrcp.pop %v1125
    %v1156 = vrcp.pop %v1127
    %v1157 = vrcp.pop %v1129
    %v1158 = vrcp.pop %v1131
    %v1159 = vrcp.pop %v1133
    %v1160 = vrcp.pop %v1135
    %v1161 = vrcp.pop %v1137
    %v1162 = vrcp.pop %v1139
    %v1163 = vrcp.pop %v1141
    %v1164 = vrcp.pop %v1143
    %v1165 = vrcp.pop %v1145
    %v1166 = vrcp.pop %v1147
    %v1167 = vrcp.pop %v1149
    %v1168 = vrcp.pop %v1151
    %v1169 = vrcp.pop %v1153
    %v1170 = vmul.f32 %v1106, %v1154
    %v1171 = vmul.f32 %v1107, %v1155
    %v1172 = vmul.f32 %v1108, %v1156
    %v1173 = vmul.f32 %v1109, %v1157
    %v1174 = vmul.f32 %v1110, %v1158
    %v1175 = vmul.f32 %v1111, %v1159
    %v1176 = vmul.f32 %v1112, %v1160
    %v1177 = vmul.f32 %v1113, %v1161
    %v1178 = vmul.f32 %v1114, %v1162
    %v1179 = vmul.f32 %v1115, %v1163
    %v1180 = vmul.f32 %v1116, %v1164
    %v1181 = vmul.f32 %v1117, %v1165
    %v1182 = vmul.f32 %v1118, %v1166
    %v1183 = vmul.f32 %v1119, %v1167
    %v1184 = vmul.f32 %v1120, %v1168
    %v1185 = vmul.f32 %v1121, %v1169
    %s1186 = scalar_lea.vmem [#allocation5], 128
    %1187 = vst [vmem:[%s1186] sm:$0xff] %v1170
    %1188 = vst [vmem:[%s1186 + $0x8] sm:$0xff] %v1171
    %1189 = vst [vmem:[%s1186 + $0x10] sm:$0xff] %v1172
    %1190 = vst [vmem:[%s1186 + $0x18] sm:$0xff] %v1173
    %1191 = vst [vmem:[%s1186 + $0x20] sm:$0xff] %v1174
    %1192 = vst [vmem:[%s1186 + $0x28] sm:$0xff] %v1175
    %1193 = vst [vmem:[%s1186 + $0x30] sm:$0xff] %v1176
    %1194 = vst [vmem:[%s1186 + $0x38] sm:$0xff] %v1177
    %1195 = vst [vmem:[%s1186 + $0x40] sm:$0xff] %v1178
    %1196 = vst [vmem:[%s1186 + $0x48] sm:$0xff] %v1179
    %1197 = vst [vmem:[%s1186 + $0x50] sm:$0xff] %v1180
    %1198 = vst [vmem:[%s1186 + $0x58] sm:$0xff] %v1181
    %1199 = vst [vmem:[%s1186 + $0x60] sm:$0xff] %v1182
    %1200 = vst [vmem:[%s1186 + $0x68] sm:$0xff] %v1183
    %1201 = vst [vmem:[%s1186 + $0x70] sm:$0xff] %v1184
    %1202 = vst [vmem:[%s1186 + $0x78] sm:$0xff] %v1185
    // Predicated region
    $region26: #{tpu_custom_call.1} parent=1 // pred_check
      _
    $region27: #{tpu_custom_call.1} parent=1 // pred_check_branch
      %1204 = sbr.rel (0) target = $region29
    $region28: #{tpu_custom_call.1} parent=1 // pred_region
      %s1206 = ssub.s32 4096, 4096
      %1207 = vsyncadd [#allocation4], %s1206
      %s1208 = sshll.u32 [#allocation5], 4
      %s1209 = int_to_ptr.vmem [resolvable:$true] %s1208
      %1214 = dma.vmem_to_hbm [thread:$0]  %s1209, 4096, %s5, [#allocation4], 128, 128, 8
    $region29: #{tpu_custom_call.1} parent=1 // pred_fallthru
      _
    // Predicated region
    $region30: #{tpu_custom_call.1} parent=1 // pred_check
      _
    $region31: #{tpu_custom_call.1} parent=1 // pred_check_branch
      %1216 = sbr.rel (0) target = $region33
    $region32: #{tpu_custom_call.1} parent=1 // pred_region
      %1217 = dma.done [#allocation4], 4096
    $region33: #{tpu_custom_call.1} parent=1 // pred_fallthru
      _
    %1218 = vsyncpa [#allocation3], 1
    %1219 = vsyncpa [#allocation4], 1

</llo_original>
